<compile_context>
chip_gen: v7x
topology: tpu7x:2x2x1
jax: 0.10.0
libtpu: 0.0.40
codegen_flags: <defaults>
</compile_context>

<pallas_src>
import functools

import numpy as np
import jax
import jax.numpy as jnp
from jax import lax
from jax.experimental import pallas as pl
from jax.experimental.pallas import tpu as pltpu


def _round_up(x, m):
    return ((x + m - 1) // m) * m


def _sublane_multiple(dtype):
    # f32 -> 8, bf16 -> 16, int8/fp8 -> 32 (keep vregs full, stores unmasked).
    return max(8, 32 // max(1, jnp.dtype(dtype).itemsize))


def _vmem_capacity_bytes():
    try:
        return int(pltpu.get_tpu_info().vmem_capacity_bytes)
    except Exception:
        return 64 << 20  # conservative (v7x per-core VMEM)


def _vmem_limit(footprint, cap):
    limit = int(footprint * 1.2) + (4 << 20)
    limit = max(limit, 32 << 20)
    limit = min(limit, max(cap - (8 << 20), 32 << 20))
    return limit


def _finalize(feats_f32, bias_row, use_abs, no_imgnorm, out_dtype):
    feats = feats_f32 + bias_row.astype(jnp.float32)
    if not no_imgnorm:
        # L2 norm over the embed dim; padded embed lanes are exactly zero so
        # they do not perturb the norm.
        sq = jnp.sum(feats * feats, axis=1, keepdims=True)
        feats = feats * lax.rsqrt(sq)
    if use_abs:
        feats = jnp.abs(feats)
    return feats.astype(out_dtype)


def _fused_kernel(x_ref, w_ref, b_ref, o_ref, *, use_abs, no_imgnorm, precision):
    # Weight-resident path: whole matmul + epilogue in one grid step per tile.
    feats = jnp.dot(x_ref[...], w_ref[...],
                    preferred_element_type=jnp.float32, precision=precision)
    o_ref[...] = _finalize(feats, b_ref[...], use_abs, no_imgnorm, o_ref.dtype)


def _ktiled_kernel(x_ref, w_ref, b_ref, o_ref, acc_ref, *, use_abs, no_imgnorm,
                   precision):
    # Fallback: K-tiled with f32 VMEM accumulator (reduction axis last).
    k = pl.program_id(1)
    prod = jnp.dot(x_ref[...], w_ref[...],
                   preferred_element_type=jnp.float32, precision=precision)

    @pl.when(k == 0)
    def _():
        acc_ref[...] = prod          # direct assign: no zero-init + read-add

    @pl.when(k > 0)
    def _():
        acc_ref[...] += prod

    @pl.when(k == pl.num_programs(1) - 1)
    def _():
        o_ref[...] = _finalize(acc_ref[...], b_ref[...], use_abs, no_imgnorm,
                               o_ref.dtype)


def make_encoder_image_precomp(weight, bias, *, use_abs=False, no_imgnorm=False,
                               param_dtype=None, precision=None,
                               plan_budget_bytes=None):
    """Build the encoder once (hoists weight.T + padding), return `apply(images)`.

    weight: (embed, img_dim), bias: (embed,).
    param_dtype: optionally store/stream the weight in a narrower dtype
                 (e.g. jnp.bfloat16 on v5e); accumulation stays f32.
    plan_budget_bytes: override the VMEM planning budget (testing/tuning knob).
    """
    E, K = weight.shape
    if param_dtype is not None:
        weight = weight.astype(param_dtype)
        bias = bias.astype(param_dtype)

    K128 = _round_up(K, 128)
    E_pad = _round_up(E, 128)

    # One-time transpose + pad to the MXU-natural, lane-dense (K128, E_pad).
    w_p = weight.T
    if (K128, E_pad) != (K, E):
        w_p = jnp.pad(w_p, ((0, K128 - K), (0, E_pad - E)))
    b_p = bias if E_pad == E else jnp.pad(bias, (0, E_pad - E))
    b_p = b_p.reshape(1, E_pad)

    wsz = w_p.dtype.itemsize
    bsz = b_p.dtype.itemsize

    def apply(images):
        B, Kin = images.shape
        assert Kin == K, f"img_dim mismatch: {Kin} vs {K}"
        isz = images.dtype.itemsize
        osz = isz
        sub = _sublane_multiple(images.dtype)

        vmem_cap = _vmem_capacity_bytes()
        budget = plan_budget_bytes if plan_budget_bytes is not None \
            else int(0.7 * vmem_cap)

        B_sub = _round_up(B, sub)

        # ---------------- weight-resident path ----------------
        fixed_res = 2 * K128 * E_pad * wsz + 2 * E_pad * bsz     # (double-buffer counted)
        per_row_res = 2 * (K128 * isz + E_pad * osz)             # x tile + out tile
        if fixed_res + 2 * sub * per_row_res <= budget:
            tm = (budget - fixed_res) // per_row_res
            tm = max(sub, (tm // sub) * sub)
            TM = min(512, B_sub, tm)
            # Give the "parallel" batch axis >=2 blocks (v7x dual-TC split).
            if B_sub <= TM and B_sub >= 2 * sub:
                TM = _round_up(pl.cdiv(B_sub, 2), sub)
            B_pad = _round_up(B, TM)

            x_p = images
            if (B_pad, K128) != (B, K):
                x_p = jnp.pad(images, ((0, B_pad - B), (0, K128 - K)))

            footprint = fixed_res + TM * per_row_res
            kernel = functools.partial(_fused_kernel, use_abs=use_abs,
                                       no_imgnorm=no_imgnorm, precision=precision)
            out = pl.pallas_call(
                kernel,
                out_shape=jax.ShapeDtypeStruct((B_pad, E_pad), images.dtype),
                grid_spec=pltpu.PrefetchScalarGridSpec(
                    num_scalar_prefetch=0,
                    grid=(B_pad // TM,),
                    in_specs=[
                        pl.BlockSpec((TM, K128), lambda i: (i, 0)),      # activations
                        pl.BlockSpec((K128, E_pad), lambda i: (0, 0)),   # weight, resident
                        pl.BlockSpec((1, E_pad), lambda i: (0, 0)),      # bias, resident
                    ],
                    out_specs=pl.BlockSpec((TM, E_pad), lambda i: (i, 0)),
                ),
                compiler_params=pltpu.CompilerParams(
                    dimension_semantics=("parallel",),
                    vmem_limit_bytes=_vmem_limit(footprint, vmem_cap),
                ),
            )(x_p, w_p, b_p)
            return out[:B, :E]

        # ---------------- K-tiled fallback (weight too big for VMEM) ----------------
        # TK: largest multiple of 128 that divides K128 and fits the budget.
        tk_cap = max(128, min(1024, (budget // 2) // max(1, 2 * E_pad * wsz)))
        tk_cap = (tk_cap // 128) * 128
        TK = 128
        t = 128
        while t <= min(tk_cap, K128):
            if K128 % t == 0:
                TK = t
            t += 128

        fixed_kt = 2 * TK * E_pad * wsz + 2 * E_pad * bsz
        per_row_kt = 2 * TK * isz + 2 * E_pad * osz + 4 * E_pad   # x, out, f32 acc
        tm = max(sub, ((budget - fixed_kt) // per_row_kt // sub) * sub)
        TM = min(512, B_sub, tm)
        if B_sub <= TM and B_sub >= 2 * sub:
            TM = _round_up(pl.cdiv(B_sub, 2), sub)
        B_pad = _round_up(B, TM)

        x_p = images
        if (B_pad, K128) != (B, K):
            x_p = jnp.pad(images, ((0, B_pad - B), (0, K128 - K)))

        footprint = fixed_kt + TM * per_row_kt
        kernel = functools.partial(_ktiled_kernel, use_abs=use_abs,
                                   no_imgnorm=no_imgnorm, precision=precision)
        out = pl.pallas_call(
            kernel,
            out_shape=jax.ShapeDtypeStruct((B_pad, E_pad), images.dtype),
            grid_spec=pltpu.PrefetchScalarGridSpec(
                num_scalar_prefetch=0,
                grid=(B_pad // TM, K128 // TK),
                in_specs=[
                    pl.BlockSpec((TM, TK), lambda i, k: (i, k)),        # activations
                    pl.BlockSpec((TK, E_pad), lambda i, k: (k, 0)),     # weight slice
                    pl.BlockSpec((1, E_pad), lambda i, k: (0, 0)),      # bias, resident
                ],
                out_specs=pl.BlockSpec((TM, E_pad), lambda i, k: (i, 0)),
                scratch_shapes=[pltpu.VMEM((TM, E_pad), jnp.float32)],
            ),
            compiler_params=pltpu.CompilerParams(
                dimension_semantics=("parallel", "arbitrary"),
                vmem_limit_bytes=_vmem_limit(footprint, vmem_cap),
            ),
        )(x_p, w_p, b_p)
        return out[:B, :E]

    return apply


def encoder_image_precomp(images, weight, bias, *, use_abs=False,
                          no_imgnorm=False):
    """One-shot convenience wrapper (prefer the factory for repeated calls)."""
    return make_encoder_image_precomp(weight, bias, use_abs=use_abs,
                                      no_imgnorm=no_imgnorm)(images)


def _reference(images, weight, bias, *, use_abs=False, no_imgnorm=False):
    feats = images.astype(jnp.float32) @ weight.astype(jnp.float32).T + bias
    if not no_imgnorm:
        norm = jnp.sqrt(jnp.sum(feats ** 2, axis=1, keepdims=True))
        feats = feats / norm
    if use_abs:
        feats = jnp.abs(feats)
    return feats


if __name__ == "__main__":
    # Small shapes: img_dim > 128 exercises a multi-vreg contraction, batch not
    # a multiple of the sublane count exercises padding/slicing.
    B, img_dim, embed_size = 20, 640, 256

    key = jax.random.PRNGKey(0)
    k_x, k_w = jax.random.split(key)

    images = jax.random.normal(k_x, (B, img_dim), dtype=jnp.float32)

    # Xavier-uniform init matching the module's init_weights(); bias = 0.
    r = np.sqrt(6.0) / np.sqrt(img_dim + embed_size)
    weight = jax.random.uniform(k_w, (embed_size, img_dim),
                                minval=-r, maxval=r, dtype=jnp.float32)
    bias = jnp.zeros((embed_size,), dtype=jnp.float32)

    ref = _reference(images, weight, bias)

    # 1) Default plan: weight-resident fused path (the common case).
    enc = make_encoder_image_precomp(weight, bias)
    out = jax.block_until_ready(enc(images))
    np.testing.assert_allclose(np.asarray(out), np.asarray(ref),
                               rtol=1e-4, atol=1e-5)

    # 2) Artificially tiny VMEM budget: exercises the K-tiled fallback path.
    enc_small = make_encoder_image_precomp(weight, bias,
                                           plan_budget_bytes=1 << 20)
    out2 = jax.block_until_ready(enc_small(images))
    np.testing.assert_allclose(np.asarray(out2), np.asarray(ref),
                               rtol=1e-4, atol=1e-5)

    print("KERNEL_OK")
</pallas_src>

<mosaic_0001>
module attributes {stable_mosaic.version = 11 : i64} {
  func.func @_fused_kernel(%arg0: i32, %arg1: memref<16x640xf32, #tpu.memory_space<vmem>>, %arg2: memref<640x256xf32, #tpu.memory_space<vmem>>, %arg3: memref<1x256xf32, #tpu.memory_space<vmem>>, %arg4: memref<16x256xf32, #tpu.memory_space<vmem>>) attributes {dimension_semantics = [#tpu.dimension_semantics<parallel>], iteration_bounds = array<i64: 2>, scalar_prefetch = 0 : i64, scratch_operands = 0 : i64, tpu.core_type = #tpu.core_type<tc>, window_params = [{transform_indices = @transform_0, window_bounds = array<i64: 16, 640>}, {pipeline_mode = #tpu.pipeline_mode<synchronous>, transform_indices = @transform_1, window_bounds = array<i64: 640, 256>}, {pipeline_mode = #tpu.pipeline_mode<synchronous>, transform_indices = @transform_2, window_bounds = array<i64: 1, 256>}, {transform_indices = @transform_3, window_bounds = array<i64: 16, 256>}]} {
    %c0 = arith.constant 0 : index
    %c0_0 = arith.constant 0 : index
    %0 = vector.load %arg1[%c0, %c0_0] : memref<16x640xf32, #tpu.memory_space<vmem>>, vector<16x640xf32>
    %c0_1 = arith.constant 0 : index
    %c0_2 = arith.constant 0 : index
    %1 = vector.load %arg2[%c0_1, %c0_2] : memref<640x256xf32, #tpu.memory_space<vmem>>, vector<640x256xf32>
    %cst = arith.constant dense<0.000000e+00> : vector<16x256xf32>
    %2 = tpu.matmul %0, %1, %cst {dimension_numbers = #tpu.dot_dimension_numbers<[1], [0], [0], [1], [0, 0, 1, 1], [], []>} : vector<16x640xf32>, vector<640x256xf32>, vector<16x256xf32> -> vector<16x256xf32>
    %c0_3 = arith.constant 0 : index
    %c0_4 = arith.constant 0 : index
    %3 = vector.load %arg3[%c0_3, %c0_4] : memref<1x256xf32, #tpu.memory_space<vmem>>, vector<1x256xf32>
    %4 = vector.broadcast %3 : vector<1x256xf32> to vector<16x256xf32>
    %5 = arith.addf %2, %4 : vector<16x256xf32>
    %6 = arith.mulf %5, %5 : vector<16x256xf32>
    %cst_5 = arith.constant dense<0.000000e+00> : vector<16xf32>
    %7 = vector.multi_reduction <add>, %6, %cst_5 [1] : vector<16x256xf32> to vector<16xf32>
    %8 = vector.shape_cast %7 : vector<16xf32> to vector<16x1xf32>
    %9 = math.rsqrt %8 : vector<16x1xf32>
    %10 = vector.broadcast %9 : vector<16x1xf32> to vector<16x256xf32>
    %11 = arith.mulf %5, %10 : vector<16x256xf32>
    %c0_6 = arith.constant 0 : index
    %c0_7 = arith.constant 0 : index
    %12 = vector.load %arg4[%c0_6, %c0_7] : memref<16x256xf32, #tpu.memory_space<vmem>>, vector<16x256xf32>
    tpu.vector_store %arg4[%c0_6, %c0_7], %11 {strides = array<i32>} : memref<16x256xf32, #tpu.memory_space<vmem>>, vector<16x256xf32>,
    return
  }
  func.func @transform_0(%arg0: i32) -> (i32, i32) {
    %c0_i32 = arith.constant 0 : i32
    %c0_i32_0 = arith.constant 0 : i32
    return %arg0, %c0_i32 : i32, i32
  }
  func.func @transform_1(%arg0: i32) -> (i32, i32) {
    %c0_i32 = arith.constant 0 : i32
    %c0_i32_0 = arith.constant 0 : i32
    %c0_i32_1 = arith.constant 0 : i32
    return %c0_i32, %c0_i32_0 : i32, i32
  }
  func.func @transform_2(%arg0: i32) -> (i32, i32) {
    %c0_i32 = arith.constant 0 : i32
    %c0_i32_0 = arith.constant 0 : i32
    %c0_i32_1 = arith.constant 0 : i32
    return %c0_i32, %c0_i32_0 : i32, i32
  }
  func.func @transform_3(%arg0: i32) -> (i32, i32) {
    %c0_i32 = arith.constant 0 : i32
    %c0_i32_0 = arith.constant 0 : i32
    return %arg0, %c0_i32 : i32, i32
  }
}

</mosaic_0001>

<llo_original>
// kernel: tpu_custom_call.1
$region0: #{tpu_custom_call.1}
  #allocation0 [shape = 'u32[]', space=smem, size = 0x4, offset = 0x4, fixed_abs, tag = 'smem constant byte address 0x4 - core index']
  #allocation1 [shape = 'u32[144,128]{1,0:T(1,128)}', space=vmem, size = 0x12000, scoped, tag = 'internal scratch']
  %s0 = inlined_call_operand.hbm [shape: f32[32,640], index: 0, kind: input, shape index: {}]
  %s1 = inlined_call_operand.hbm [shape: f32[640,256], index: 1, kind: input, shape index: {}]
  %s2 = inlined_call_operand.vmem [shape: f32[1,256], index: 2, kind: input, shape index: {}]
  %s3 = inlined_call_operand.hbm [shape: f32[32,256], index: 3, kind: output, shape index: {}]
  %s4 = sld [smem:[#allocation0]]
  $region53: #{tpu_custom_call.1} parent=0
    _
  %s6 = ssub.s32 1, %s4
  %s7 = scalar_select 0, %s6, %s4
  $region1: #{tpu_custom_call.1} parent=0
    #allocation2 [shape = 'u8[81920]{0}', space=vmem, size = 0x14000, scoped, tag = 'input window, operand 0']
    #allocation3 [shape = 's32[2]{0}', space=sflag, size = 0x8, scoped, tag = 'scoped memory for tpu_custom_call.1']
    #allocation4 [shape = 's32[2]{0}', space=sflag, size = 0x8, scoped, tag = 'scoped memory for tpu_custom_call.1']
    #allocation5 [shape = 'u8[655360]{0}', space=vmem, size = 0xa0000, scoped, tag = 'input window, operand 1, single buffered']
    #allocation6 [shape = 's32[1]{0}', space=sflag, size = 0x4, scoped, tag = 'scoped memory for tpu_custom_call.1']
    #allocation7 [shape = 'u8[32768]{0}', space=vmem, size = 0x8000, scoped, tag = 'output window, operand 0']
    %8 = vsyncpa [#allocation3], 0
    %s9 = scalar_lea.sflag [#allocation3], 1
    %10 = vsyncpa %s9, 0
    %11 = vsyncpa [#allocation6], 0
    %12 = vsyncpa [#allocation4], 0
    %s13 = scalar_lea.sflag [#allocation4], 1
    %14 = vsyncpa %s13, 0
    loop: start=0, step=1, limit=4
    $region2: #{tpu_custom_call.1} parent=1 // loop_pre_header
      _
    $region3: #{tpu_custom_call.1} parent=1 // loop_header
      %s16 = sphi 0, %s20
      %p17 = scmp.ge.s32.totalorder %s16, 4
      %s26 = sphi 0, %s28
      %s29 = sphi 0, %s26
      %s30 = sphi 0, %s29
      %s46 = sphi 0, %s30
      %s50 = sphi 0, %s50
      %s52 = sphi 0, %s50
      %s53 = sphi 0, %s52
      %s67 = sphi 0, %s53
      %s71 = sphi 0, %s71
      %s73 = sphi 0, %s71
      %s74 = sphi 0, %s73
      %s88 = sphi 0, %s74
      %s94 = sphi 0, %s96
      %s97 = sphi 0, %s94
      %s98 = sphi 0, %s97
      %s114 = sphi 0, %s98
    $region4: #{tpu_custom_call.1} parent=1 // loop_header_branch
      %19 = sbr.rel (%p17) target = $region8
    $region5: #{tpu_custom_call.1} parent=1 // loop_body
      %s21 = ssub.s32 %s16, 1
      %s22 = ssub.s32 %s16, 2
      %s23 = sadd.s32 %s16, 1
      %s24 = ssub.s32 %s16, %s23
      %p25 = scmp.eq.s32.totalorder %s24, 0
      %s27 = sadd.s32 %s26, 1
      %s28 = scalar_select %p25, %s26, %s27
      %p31 = pneg %p25
      %p32 = scmp.eq.s32.totalorder %s16, 1
      %p33 = por %p31, %p32
      %p34 = scmp.ne.s32.totalorder %s26, %s29
      %p35 = scmp.eq.s32.totalorder %s16, 0
      %p36 = por %p34, %p35
      %p37 = scmp.ne.s32.totalorder %s26, %s29
      %p38 = scmp.eq.s32.totalorder %s21, 1
      %p39 = por %p37, %p38
      %p40 = scmp.ne.s32.totalorder %s29, %s30
      %p41 = scmp.eq.s32.totalorder %s21, 0
      %p42 = por %p40, %p41
      %p43 = scmp.ne.s32.totalorder %s29, %s30
      %p44 = scmp.eq.s32.totalorder %s22, 1
      %p45 = por %p43, %p44
      %p47 = scmp.ne.s32.totalorder %s30, %s46
      %p48 = scmp.eq.s32.totalorder %s22, 0
      %p49 = por %p47, %p48
      %s51 = sadd.s32 %s50, 1
      %p54 = scmp.eq.s32.totalorder %s16, 1
      %p55 = scmp.ne.s32.totalorder %s50, %s52
      %p56 = scmp.eq.s32.totalorder %s16, 0
      %p57 = por %p55, %p56
      %p58 = scmp.ne.s32.totalorder %s50, %s52
      %p59 = scmp.eq.s32.totalorder %s21, 1
      %p60 = por %p58, %p59
      %p61 = scmp.ne.s32.totalorder %s52, %s53
      %p62 = scmp.eq.s32.totalorder %s21, 0
      %p63 = por %p61, %p62
      %p64 = scmp.ne.s32.totalorder %s52, %s53
      %p65 = scmp.eq.s32.totalorder %s22, 1
      %p66 = por %p64, %p65
      %p68 = scmp.ne.s32.totalorder %s53, %s67
      %p69 = scmp.eq.s32.totalorder %s22, 0
      %p70 = por %p68, %p69
      %s72 = sadd.s32 %s71, 1
      %p75 = scmp.eq.s32.totalorder %s16, 1
      %p76 = scmp.ne.s32.totalorder %s71, %s73
      %p77 = scmp.eq.s32.totalorder %s16, 0
      %p78 = por %p76, %p77
      %p79 = scmp.ne.s32.totalorder %s71, %s73
      %p80 = scmp.eq.s32.totalorder %s21, 1
      %p81 = por %p79, %p80
      %p82 = scmp.ne.s32.totalorder %s73, %s74
      %p83 = scmp.eq.s32.totalorder %s21, 0
      %p84 = por %p82, %p83
      %p85 = scmp.ne.s32.totalorder %s73, %s74
      %p86 = scmp.eq.s32.totalorder %s22, 1
      %p87 = por %p85, %p86
      %p89 = scmp.ne.s32.totalorder %s74, %s88
      %p90 = scmp.eq.s32.totalorder %s22, 0
      %p91 = por %p89, %p90
      %s92 = ssub.s32 %s16, %s23
      %p93 = scmp.eq.s32.totalorder %s92, 0
      %s95 = sadd.s32 %s94, 1
      %s96 = scalar_select %p93, %s94, %s95
      %p99 = pneg %p93
      %p100 = scmp.eq.s32.totalorder %s16, 1
      %p101 = por %p99, %p100
      %p102 = scmp.ne.s32.totalorder %s94, %s97
      %p103 = scmp.eq.s32.totalorder %s16, 0
      %p104 = por %p102, %p103
      %p105 = scmp.ne.s32.totalorder %s94, %s97
      %p106 = scmp.eq.s32.totalorder %s21, 1
      %p107 = por %p105, %p106
      %p108 = scmp.ne.s32.totalorder %s97, %s98
      %p109 = scmp.eq.s32.totalorder %s21, 0
      %p110 = por %p108, %p109
      %p111 = scmp.ne.s32.totalorder %s97, %s98
      %p112 = scmp.eq.s32.totalorder %s22, 1
      %p113 = por %p111, %p112
      %p115 = scmp.ne.s32.totalorder %s98, %s114
      %p116 = scmp.eq.s32.totalorder %s22, 0
      %p117 = por %p115, %p116
      %p118 = scmp.le.s32.totalorder 1, %s16
      %p119 = scmp.lt.s32.totalorder %s16, 3
      %p120 = pnand %p118, %p119
      %p121 = pneg %p120
      // Predicated region
      $region9: #{tpu_custom_call.1} parent=5 // pred_check
        _
      $region10: #{tpu_custom_call.1} parent=5 // pred_check_branch
        %123 = sbr.rel (%p120) target = $region12
      $region11: #{tpu_custom_call.1} parent=5 // pred_region
        %s124 = ssub.s32 %s16, 1
        // Predicated region
        $region13: #{tpu_custom_call.1} parent=11 // pred_check
          %p125 = pneg %p63
        $region14: #{tpu_custom_call.1} parent=11 // pred_check_branch
          %127 = sbr.rel (%p125) target = $region16
        $region15: #{tpu_custom_call.1} parent=11 // pred_region
          %s129 = ssub.s32 20480, 20480
          %130 = vsyncadd [#allocation6], %s129
          %s131 = sshll.u32 [#allocation5], 4
          %s132 = int_to_ptr.vmem [resolvable:$true] %s131
          %137 = dma.hbm_to_vmem [thread:$0]  %s1, 20480, %s132, [#allocation6], 256, 256, 16
        $region16: #{tpu_custom_call.1} parent=11 // pred_fallthru
          _
        // Predicated region
        $region17: #{tpu_custom_call.1} parent=11 // pred_check
          %p138 = pneg %p84
        $region18: #{tpu_custom_call.1} parent=11 // pred_check_branch
          %140 = sbr.rel (%p138) target = $region20
        $region19: #{tpu_custom_call.1} parent=11 // pred_region
          _
        $region20: #{tpu_custom_call.1} parent=11 // pred_fallthru
          _
      $region12: #{tpu_custom_call.1} parent=5 // pred_fallthru
        _
      %p141 = scmp.lt.s32.totalorder %s16, 2
      // Predicated region
      $region21: #{tpu_custom_call.1} parent=5 // pred_check
        %p142 = pneg %p141
      $region22: #{tpu_custom_call.1} parent=5 // pred_check_branch
        %144 = sbr.rel (%p142) target = $region24
      $region23: #{tpu_custom_call.1} parent=5 // pred_region
        // Predicated region
        $region25: #{tpu_custom_call.1} parent=23 // pred_check
          %p145 = pneg %p36
        $region26: #{tpu_custom_call.1} parent=23 // pred_check_branch
          %147 = sbr.rel (%p145) target = $region28
        $region27: #{tpu_custom_call.1} parent=23 // pred_region
          %s148 = sand.u32 %s26, 1
          %s149 = scalar_lea.sflag [#allocation3], %s148
          %s150 = sand.u32 %s26, 1
          %s151 = smul.addr %s150, 80
          %s152 = scalar_lea.vmem [#allocation2], %s151
          %s153 = smul.u32 2, %s16
          %s155 = ssub.s32 1280, 1280
          %156 = vsyncadd %s149, %s155
          %s157 = smul.addr %s153, 5
          %s158 = smul.addr %s157, 128
          %s159 = scalar_lea.hbm %s0, %s158
          %s160 = sshll.u32 %s152, 4
          %s161 = int_to_ptr.vmem [resolvable:$true] %s160
          %166 = dma.hbm_to_vmem [thread:$0]  %s159, 1280, %s161, %s149, 640, 640, 40
        $region28: #{tpu_custom_call.1} parent=23 // pred_fallthru
          _
      $region24: #{tpu_custom_call.1} parent=5 // pred_fallthru
        _
      %p167 = scmp.le.s32.totalorder 1, %s16
      %p168 = scmp.lt.s32.totalorder %s16, 3
      %p169 = pnand %p167, %p168
      %p170 = pneg %p169
      // Predicated region
      $region29: #{tpu_custom_call.1} parent=5 // pred_check
        _
      $region30: #{tpu_custom_call.1} parent=5 // pred_check_branch
        %172 = sbr.rel (%p169) target = $region32
      $region31: #{tpu_custom_call.1} parent=5 // pred_region
        %s173 = ssub.s32 %s16, 1
        %s174 = sand.u32 %s29, 1
        %s175 = scalar_lea.sflag [#allocation3], %s174
        %s176 = sand.u32 %s29, 1
        %s177 = smul.addr %s176, 80
        %s178 = scalar_lea.vmem [#allocation2], %s177
        // Predicated region
        $region33: #{tpu_custom_call.1} parent=31 // pred_check
          %p179 = pneg %p42
        $region34: #{tpu_custom_call.1} parent=31 // pred_check_branch
          %181 = sbr.rel (%p179) target = $region36
        $region35: #{tpu_custom_call.1} parent=31 // pred_region
          %182 = dma.done %s175, 1280
        $region36: #{tpu_custom_call.1} parent=31 // pred_fallthru
          _
        // Predicated region
        $region37: #{tpu_custom_call.1} parent=31 // pred_check
          %p183 = pneg %p63
        $region38: #{tpu_custom_call.1} parent=31 // pred_check_branch
          %185 = sbr.rel (%p183) target = $region40
        $region39: #{tpu_custom_call.1} parent=31 // pred_region
          %186 = dma.done [#allocation6], 20480
        $region40: #{tpu_custom_call.1} parent=31 // pred_fallthru
          _
        %s187 = sand.u32 %s29, 1
        %s188 = scalar_lea.sflag [#allocation3], %s187
        %s189 = sand.u32 %s29, 1
        %s190 = smul.addr %s189, 80
        %s191 = scalar_lea.vmem [#allocation2], %s190
        %p192 = pneg %p42
        %p193 = pneg %p39
        %p194 = pneg %p63
        %p195 = pneg %p60
        %p196 = pneg %p84
        %p197 = pneg %p81
        %p198 = pneg %p110
        %p199 = pneg %p107
        %s200 = sand.u32 %s97, 1
        %s201 = scalar_lea.sflag [#allocation4], %s200
        %s202 = sand.u32 %s97, 1
        %s203 = smul.addr %s202, 32
        %s204 = scalar_lea.vmem [#allocation7], %s203
        %s205 = smul.u32 2, %s21
        %s206 = smul.u32 2, %s21
        %v207 = vld [vmem:[%s178] sm:$0xff]
        %v208 = vld [vmem:[%s178 + $0x8] sm:$0xff]
        %v209 = vld [vmem:[%s178 + $0x10] sm:$0xff]
        %v210 = vld [vmem:[%s178 + $0x18] sm:$0xff]
        %v211 = vld [vmem:[%s178 + $0x20] sm:$0xff]
        %v212 = vld [vmem:[%s178 + $0x28] sm:$0xff]
        %v213 = vld [vmem:[%s178 + $0x30] sm:$0xff]
        %v214 = vld [vmem:[%s178 + $0x38] sm:$0xff]
        %v215 = vld [vmem:[%s178 + $0x40] sm:$0xff]
        %v216 = vld [vmem:[%s178 + $0x48] sm:$0xff]
        %v217 = vld [vmem:[#allocation5] sm:$0xff]
        %v218 = vld [vmem:[#allocation5 + $0x8] sm:$0xff]
        %v219 = vld [vmem:[#allocation5 + $0x10] sm:$0xff]
        %v220 = vld [vmem:[#allocation5 + $0x18] sm:$0xff]
        %v221 = vld [vmem:[#allocation5 + $0x20] sm:$0xff]
        %v222 = vld [vmem:[#allocation5 + $0x28] sm:$0xff]
        %v223 = vld [vmem:[#allocation5 + $0x30] sm:$0xff]
        %v224 = vld [vmem:[#allocation5 + $0x38] sm:$0xff]
        %v225 = vld [vmem:[#allocation5 + $0x40] sm:$0xff]
        %v226 = vld [vmem:[#allocation5 + $0x48] sm:$0xff]
        %v227 = vld [vmem:[#allocation5 + $0x50] sm:$0xff]
        %v228 = vld [vmem:[#allocation5 + $0x58] sm:$0xff]
        %v229 = vld [vmem:[#allocation5 + $0x60] sm:$0xff]
        %v230 = vld [vmem:[#allocation5 + $0x68] sm:$0xff]
        %v231 = vld [vmem:[#allocation5 + $0x70] sm:$0xff]
        %v232 = vld [vmem:[#allocation5 + $0x78] sm:$0xff]
        %v233 = vld [vmem:[#allocation5 + $0x80] sm:$0xff]
        %v234 = vld [vmem:[#allocation5 + $0x88] sm:$0xff]
        %v235 = vld [vmem:[#allocation5 + $0x90] sm:$0xff]
        %v236 = vld [vmem:[#allocation5 + $0x98] sm:$0xff]
        %v237 = vld [vmem:[#allocation5 + $0xa0] sm:$0xff]
        %v238 = vld [vmem:[#allocation5 + $0xa8] sm:$0xff]
        %v239 = vld [vmem:[#allocation5 + $0xb0] sm:$0xff]
        %v240 = vld [vmem:[#allocation5 + $0xb8] sm:$0xff]
        %v241 = vld [vmem:[#allocation5 + $0xc0] sm:$0xff]
        %v242 = vld [vmem:[#allocation5 + $0xc8] sm:$0xff]
        %v243 = vld [vmem:[#allocation5 + $0xd0] sm:$0xff]
        %v244 = vld [vmem:[#allocation5 + $0xd8] sm:$0xff]
        %v245 = vld [vmem:[#allocation5 + $0xe0] sm:$0xff]
        %v246 = vld [vmem:[#allocation5 + $0xe8] sm:$0xff]
        %v247 = vld [vmem:[#allocation5 + $0xf0] sm:$0xff]
        %v248 = vld [vmem:[#allocation5 + $0xf8] sm:$0xff]
        %v249 = vld [vmem:[#allocation5 + $0x100] sm:$0xff]
        %v250 = vld [vmem:[#allocation5 + $0x108] sm:$0xff]
        %v251 = vld [vmem:[#allocation5 + $0x110] sm:$0xff]
        %v252 = vld [vmem:[#allocation5 + $0x118] sm:$0xff]
        %v253 = vld [vmem:[#allocation5 + $0x120] sm:$0xff]
        %v254 = vld [vmem:[#allocation5 + $0x128] sm:$0xff]
        %v255 = vld [vmem:[#allocation5 + $0x130] sm:$0xff]
        %v256 = vld [vmem:[#allocation5 + $0x138] sm:$0xff]
        %v257 = vld [vmem:[#allocation5 + $0x140] sm:$0xff]
        %v258 = vld [vmem:[#allocation5 + $0x148] sm:$0xff]
        %v259 = vld [vmem:[#allocation5 + $0x150] sm:$0xff]
        %v260 = vld [vmem:[#allocation5 + $0x158] sm:$0xff]
        %v261 = vld [vmem:[#allocation5 + $0x160] sm:$0xff]
        %v262 = vld [vmem:[#allocation5 + $0x168] sm:$0xff]
        %v263 = vld [vmem:[#allocation5 + $0x170] sm:$0xff]
        %v264 = vld [vmem:[#allocation5 + $0x178] sm:$0xff]
        %v265 = vld [vmem:[#allocation5 + $0x180] sm:$0xff]
        %v266 = vld [vmem:[#allocation5 + $0x188] sm:$0xff]
        %v267 = vld [vmem:[#allocation5 + $0x190] sm:$0xff]
        %v268 = vld [vmem:[#allocation5 + $0x198] sm:$0xff]
        %v269 = vld [vmem:[#allocation5 + $0x1a0] sm:$0xff]
        %v270 = vld [vmem:[#allocation5 + $0x1a8] sm:$0xff]
        %v271 = vld [vmem:[#allocation5 + $0x1b0] sm:$0xff]
        %v272 = vld [vmem:[#allocation5 + $0x1b8] sm:$0xff]
        %v273 = vld [vmem:[#allocation5 + $0x1c0] sm:$0xff]
        %v274 = vld [vmem:[#allocation5 + $0x1c8] sm:$0xff]
        %v275 = vld [vmem:[#allocation5 + $0x1d0] sm:$0xff]
        %v276 = vld [vmem:[#allocation5 + $0x1d8] sm:$0xff]
        %v277 = vld [vmem:[#allocation5 + $0x1e0] sm:$0xff]
        %v278 = vld [vmem:[#allocation5 + $0x1e8] sm:$0xff]
        %v279 = vld [vmem:[#allocation5 + $0x1f0] sm:$0xff]
        %v280 = vld [vmem:[#allocation5 + $0x1f8] sm:$0xff]
        %v281 = vld [vmem:[#allocation5 + $0x200] sm:$0xff]
        %v282 = vld [vmem:[#allocation5 + $0x208] sm:$0xff]
        %v283 = vld [vmem:[#allocation5 + $0x210] sm:$0xff]
        %v284 = vld [vmem:[#allocation5 + $0x218] sm:$0xff]
        %v285 = vld [vmem:[#allocation5 + $0x220] sm:$0xff]
        %v286 = vld [vmem:[#allocation5 + $0x228] sm:$0xff]
        %v287 = vld [vmem:[#allocation5 + $0x230] sm:$0xff]
        %v288 = vld [vmem:[#allocation5 + $0x238] sm:$0xff]
        %v289 = vld [vmem:[#allocation5 + $0x240] sm:$0xff]
        %v290 = vld [vmem:[#allocation5 + $0x248] sm:$0xff]
        %v291 = vld [vmem:[#allocation5 + $0x250] sm:$0xff]
        %v292 = vld [vmem:[#allocation5 + $0x258] sm:$0xff]
        %v293 = vld [vmem:[#allocation5 + $0x260] sm:$0xff]
        %v294 = vld [vmem:[#allocation5 + $0x268] sm:$0xff]
        %v295 = vld [vmem:[#allocation5 + $0x270] sm:$0xff]
        %v296 = vld [vmem:[#allocation5 + $0x278] sm:$0xff]
        %v297 = vld [vmem:[#allocation5 + $0x280] sm:$0xff]
        %v298 = vld [vmem:[#allocation5 + $0x288] sm:$0xff]
        %v299 = vld [vmem:[#allocation5 + $0x290] sm:$0xff]
        %v300 = vld [vmem:[#allocation5 + $0x298] sm:$0xff]
        %v301 = vld [vmem:[#allocation5 + $0x2a0] sm:$0xff]
        %v302 = vld [vmem:[#allocation5 + $0x2a8] sm:$0xff]
        %v303 = vld [vmem:[#allocation5 + $0x2b0] sm:$0xff]
        %v304 = vld [vmem:[#allocation5 + $0x2b8] sm:$0xff]
        %v305 = vld [vmem:[#allocation5 + $0x2c0] sm:$0xff]
        %v306 = vld [vmem:[#allocation5 + $0x2c8] sm:$0xff]
        %v307 = vld [vmem:[#allocation5 + $0x2d0] sm:$0xff]
        %v308 = vld [vmem:[#allocation5 + $0x2d8] sm:$0xff]
        %v309 = vld [vmem:[#allocation5 + $0x2e0] sm:$0xff]
        %v310 = vld [vmem:[#allocation5 + $0x2e8] sm:$0xff]
        %v311 = vld [vmem:[#allocation5 + $0x2f0] sm:$0xff]
        %v312 = vld [vmem:[#allocation5 + $0x2f8] sm:$0xff]
        %v313 = vld [vmem:[#allocation5 + $0x300] sm:$0xff]
        %v314 = vld [vmem:[#allocation5 + $0x308] sm:$0xff]
        %v315 = vld [vmem:[#allocation5 + $0x310] sm:$0xff]
        %v316 = vld [vmem:[#allocation5 + $0x318] sm:$0xff]
        %v317 = vld [vmem:[#allocation5 + $0x320] sm:$0xff]
        %v318 = vld [vmem:[#allocation5 + $0x328] sm:$0xff]
        %v319 = vld [vmem:[#allocation5 + $0x330] sm:$0xff]
        %v320 = vld [vmem:[#allocation5 + $0x338] sm:$0xff]
        %v321 = vld [vmem:[#allocation5 + $0x340] sm:$0xff]
        %v322 = vld [vmem:[#allocation5 + $0x348] sm:$0xff]
        %v323 = vld [vmem:[#allocation5 + $0x350] sm:$0xff]
        %v324 = vld [vmem:[#allocation5 + $0x358] sm:$0xff]
        %v325 = vld [vmem:[#allocation5 + $0x360] sm:$0xff]
        %v326 = vld [vmem:[#allocation5 + $0x368] sm:$0xff]
        %v327 = vld [vmem:[#allocation5 + $0x370] sm:$0xff]
        %v328 = vld [vmem:[#allocation5 + $0x378] sm:$0xff]
        %v329 = vld [vmem:[#allocation5 + $0x380] sm:$0xff]
        %v330 = vld [vmem:[#allocation5 + $0x388] sm:$0xff]
        %v331 = vld [vmem:[#allocation5 + $0x390] sm:$0xff]
        %v332 = vld [vmem:[#allocation5 + $0x398] sm:$0xff]
        %v333 = vld [vmem:[#allocation5 + $0x3a0] sm:$0xff]
        %v334 = vld [vmem:[#allocation5 + $0x3a8] sm:$0xff]
        %v335 = vld [vmem:[#allocation5 + $0x3b0] sm:$0xff]
        %v336 = vld [vmem:[#allocation5 + $0x3b8] sm:$0xff]
        %v337 = vld [vmem:[#allocation5 + $0x3c0] sm:$0xff]
        %v338 = vld [vmem:[#allocation5 + $0x3c8] sm:$0xff]
        %v339 = vld [vmem:[#allocation5 + $0x3d0] sm:$0xff]
        %v340 = vld [vmem:[#allocation5 + $0x3d8] sm:$0xff]
        %v341 = vld [vmem:[#allocation5 + $0x3e0] sm:$0xff]
        %v342 = vld [vmem:[#allocation5 + $0x3e8] sm:$0xff]
        %v343 = vld [vmem:[#allocation5 + $0x3f0] sm:$0xff]
        %v344 = vld [vmem:[#allocation5 + $0x3f8] sm:$0xff]
        %v345 = vld [vmem:[#allocation5 + $0x400] sm:$0xff]
        %v346 = vld [vmem:[#allocation5 + $0x408] sm:$0xff]
        %v347 = vld [vmem:[#allocation5 + $0x410] sm:$0xff]
        %v348 = vld [vmem:[#allocation5 + $0x418] sm:$0xff]
        %v349 = vld [vmem:[#allocation5 + $0x420] sm:$0xff]
        %v350 = vld [vmem:[#allocation5 + $0x428] sm:$0xff]
        %v351 = vld [vmem:[#allocation5 + $0x430] sm:$0xff]
        %v352 = vld [vmem:[#allocation5 + $0x438] sm:$0xff]
        %v353 = vld [vmem:[#allocation5 + $0x440] sm:$0xff]
        %v354 = vld [vmem:[#allocation5 + $0x448] sm:$0xff]
        %v355 = vld [vmem:[#allocation5 + $0x450] sm:$0xff]
        %v356 = vld [vmem:[#allocation5 + $0x458] sm:$0xff]
        %v357 = vld [vmem:[#allocation5 + $0x460] sm:$0xff]
        %v358 = vld [vmem:[#allocation5 + $0x468] sm:$0xff]
        %v359 = vld [vmem:[#allocation5 + $0x470] sm:$0xff]
        %v360 = vld [vmem:[#allocation5 + $0x478] sm:$0xff]
        %v361 = vld [vmem:[#allocation5 + $0x480] sm:$0xff]
        %v362 = vld [vmem:[#allocation5 + $0x488] sm:$0xff]
        %v363 = vld [vmem:[#allocation5 + $0x490] sm:$0xff]
        %v364 = vld [vmem:[#allocation5 + $0x498] sm:$0xff]
        %v365 = vld [vmem:[#allocation5 + $0x4a0] sm:$0xff]
        %v366 = vld [vmem:[#allocation5 + $0x4a8] sm:$0xff]
        %v367 = vld [vmem:[#allocation5 + $0x4b0] sm:$0xff]
        %v368 = vld [vmem:[#allocation5 + $0x4b8] sm:$0xff]
        %v369 = vld [vmem:[#allocation5 + $0x4c0] sm:$0xff]
        %v370 = vld [vmem:[#allocation5 + $0x4c8] sm:$0xff]
        %v371 = vld [vmem:[#allocation5 + $0x4d0] sm:$0xff]
        %v372 = vld [vmem:[#allocation5 + $0x4d8] sm:$0xff]
        %v373 = vld [vmem:[#allocation5 + $0x4e0] sm:$0xff]
        %v374 = vld [vmem:[#allocation5 + $0x4e8] sm:$0xff]
        %v375 = vld [vmem:[#allocation5 + $0x4f0] sm:$0xff]
        %v376 = vld [vmem:[#allocation5 + $0x4f8] sm:$0xff]
        %v377 = vld [vmem:[%s2] sm:$0x3]
        %v379 = vlaneseq
        %v380 = vshrl.u32 %v379, 7
        %v381 = vsub.s32 0, %v380
        %v382 = vrot.slane %v377, %v381
        %v383 = vlaneseq
        %v384 = vshrl.u32 %v383, 7
        %v385 = vsub.s32 1, %v384
        %v386 = vrot.slane %v377, %v385
        %389 = vmatprep.subr.mxu0 %v218
        %390 = vmatpush1.msra.mxu0 %v217
        %391 = vmatprep.subr.mxu0 %v220
        %392 = vmatpush1.msra.mxu0 %v219
        %393 = vmatprep.subr.mxu0 %v222
        %394 = vmatpush1.msra.mxu0 %v221
        %395 = vmatprep.subr.mxu0 %v224
        %396 = vmatpush1.msra.mxu0 %v223
        %397 = vmatprep.subr.mxu0 %v226
        %398 = vmatpush1.msra.mxu0 %v225
        %399 = vmatprep.subr.mxu0 %v228
        %400 = vmatpush1.msra.mxu0 %v227
        %401 = vmatprep.subr.mxu0 %v230
        %402 = vmatpush1.msra.mxu0 %v229
        %403 = vmatprep.subr.mxu0 %v232
        %404 = vmatpush1.msra.mxu0 %v231
        %405 = vmatprep.subr.mxu0 %v234
        %406 = vmatpush1.msra.mxu0 %v233
        %407 = vmatprep.subr.mxu0 %v236
        %408 = vmatpush1.msra.mxu0 %v235
        %409 = vmatprep.subr.mxu0 %v238
        %410 = vmatpush1.msra.mxu0 %v237
        %411 = vmatprep.subr.mxu0 %v240
        %412 = vmatpush1.msra.mxu0 %v239
        %413 = vmatprep.subr.mxu0 %v242
        %414 = vmatpush1.msra.mxu0 %v241
        %415 = vmatprep.subr.mxu0 %v244
        %416 = vmatpush1.msra.mxu0 %v243
        %417 = vmatprep.subr.mxu0 %v246
        %418 = vmatpush1.msra.mxu0 %v245
        %419 = vmatprep.subr.mxu0 %v248
        %420 = vmatpush1.msra.mxu0 %v247
        %421 = vmatprep.subr.mxu0 %v250
        %422 = vmatpush1.msra.mxu0 %v249
        %423 = vmatprep.subr.mxu0 %v252
        %424 = vmatpush1.msra.mxu0 %v251
        %425 = vmatprep.subr.mxu0 %v254
        %426 = vmatpush1.msra.mxu0 %v253
        %427 = vmatprep.subr.mxu0 %v256
        %428 = vmatpush1.msra.mxu0 %v255
        %429 = vmatprep.subr.mxu0 %v258
        %430 = vmatpush1.msra.mxu0 %v257
        %431 = vmatprep.subr.mxu0 %v260
        %432 = vmatpush1.msra.mxu0 %v259
        %433 = vmatprep.subr.mxu0 %v262
        %434 = vmatpush1.msra.mxu0 %v261
        %435 = vmatprep.subr.mxu0 %v264
        %436 = vmatpush1.msra.mxu0 %v263
        %437 = vmatprep.subr.mxu0 %v266
        %438 = vmatpush1.msra.mxu0 %v265
        %439 = vmatprep.subr.mxu0 %v268
        %440 = vmatpush1.msra.mxu0 %v267
        %441 = vmatprep.subr.mxu0 %v270
        %442 = vmatpush1.msra.mxu0 %v269
        %443 = vmatprep.subr.mxu0 %v272
        %444 = vmatpush1.msra.mxu0 %v271
        %445 = vmatprep.subr.mxu0 %v274
        %446 = vmatpush1.msra.mxu0 %v273
        %447 = vmatprep.subr.mxu0 %v276
        %448 = vmatpush1.msra.mxu0 %v275
        %449 = vmatprep.subr.mxu0 %v278
        %450 = vmatpush1.msra.mxu0 %v277
        %451 = vmatprep.subr.mxu0 %v280
        %452 = vmatpush1.msra.mxu0 %v279
        %453 = vmatprep.mubr.f32.mxu0 %v208
        %454 = vmatmul.mubr.f32.gmra.mrb[0].mxu0 %v207
        %v455 = vpop.f32.mrb[0].mxu0
        %v456 = vadd.f32 %v382, %v455
        %v457 = vpop.f32.mrb[0].mxu0
        %v458 = vadd.f32 %v386, %v457
        %459 = vmatprep.mubr.f32.mxu0 %v213
        %460 = vmatmul.mubr.f32.gmra.mrb[0].mxu0 %v212
        %v461 = vpop.f32.mrb[0].mxu0
        %v462 = vadd.f32 %v382, %v461
        %v463 = vpop.f32.mrb[0].mxu0
        %v464 = vadd.f32 %v386, %v463
        %465 = vdwg.mxu0
        %466 = vmatprep.subr.mxu0 %v282
        %467 = vmatpush1.msra.mxu0 %v281
        %468 = vmatprep.subr.mxu0 %v284
        %469 = vmatpush1.msra.mxu0 %v283
        %470 = vmatprep.subr.mxu0 %v286
        %471 = vmatpush1.msra.mxu0 %v285
        %472 = vmatprep.subr.mxu0 %v288
        %473 = vmatpush1.msra.mxu0 %v287
        %474 = vmatprep.subr.mxu0 %v290
        %475 = vmatpush1.msra.mxu0 %v289
        %476 = vmatprep.subr.mxu0 %v292
        %477 = vmatpush1.msra.mxu0 %v291
        %478 = vmatprep.subr.mxu0 %v294
        %479 = vmatpush1.msra.mxu0 %v293
        %480 = vmatprep.subr.mxu0 %v296
        %481 = vmatpush1.msra.mxu0 %v295
        %482 = vmatprep.subr.mxu0 %v298
        %483 = vmatpush1.msra.mxu0 %v297
        %484 = vmatprep.subr.mxu0 %v300
        %485 = vmatpush1.msra.mxu0 %v299
        %486 = vmatprep.subr.mxu0 %v302
        %487 = vmatpush1.msra.mxu0 %v301
        %488 = vmatprep.subr.mxu0 %v304
        %489 = vmatpush1.msra.mxu0 %v303
        %490 = vmatprep.subr.mxu0 %v306
        %491 = vmatpush1.msra.mxu0 %v305
        %492 = vmatprep.subr.mxu0 %v308
        %493 = vmatpush1.msra.mxu0 %v307
        %494 = vmatprep.subr.mxu0 %v310
        %495 = vmatpush1.msra.mxu0 %v309
        %496 = vmatprep.subr.mxu0 %v312
        %497 = vmatpush1.msra.mxu0 %v311
        %498 = vmatprep.subr.mxu0 %v314
        %499 = vmatpush1.msra.mxu0 %v313
        %500 = vmatprep.subr.mxu0 %v316
        %501 = vmatpush1.msra.mxu0 %v315
        %502 = vmatprep.subr.mxu0 %v318
        %503 = vmatpush1.msra.mxu0 %v317
        %504 = vmatprep.subr.mxu0 %v320
        %505 = vmatpush1.msra.mxu0 %v319
        %506 = vmatprep.subr.mxu0 %v322
        %507 = vmatpush1.msra.mxu0 %v321
        %508 = vmatprep.subr.mxu0 %v324
        %509 = vmatpush1.msra.mxu0 %v323
        %510 = vmatprep.subr.mxu0 %v326
        %511 = vmatpush1.msra.mxu0 %v325
        %512 = vmatprep.subr.mxu0 %v328
        %513 = vmatpush1.msra.mxu0 %v327
        %514 = vmatprep.subr.mxu0 %v330
        %515 = vmatpush1.msra.mxu0 %v329
        %516 = vmatprep.subr.mxu0 %v332
        %517 = vmatpush1.msra.mxu0 %v331
        %518 = vmatprep.subr.mxu0 %v334
        %519 = vmatpush1.msra.mxu0 %v333
        %520 = vmatprep.subr.mxu0 %v336
        %521 = vmatpush1.msra.mxu0 %v335
        %522 = vmatprep.subr.mxu0 %v338
        %523 = vmatpush1.msra.mxu0 %v337
        %524 = vmatprep.subr.mxu0 %v340
        %525 = vmatpush1.msra.mxu0 %v339
        %526 = vmatprep.subr.mxu0 %v342
        %527 = vmatpush1.msra.mxu0 %v341
        %528 = vmatprep.subr.mxu0 %v344
        %529 = vmatpush1.msra.mxu0 %v343
        %530 = vmatprep.mubr.f32.mxu0 %v210
        %531 = vmatmul.mubr.f32.gmra.mrb[0].mxu0 %v209
        %v532 = vpop.f32.mrb[0].mxu0
        %v533 = vadd.f32 %v456, %v532
        %v534 = vpop.f32.mrb[0].mxu0
        %v535 = vadd.f32 %v458, %v534
        %536 = vmatprep.mubr.f32.mxu0 %v215
        %537 = vmatmul.mubr.f32.gmra.mrb[0].mxu0 %v214
        %v538 = vpop.f32.mrb[0].mxu0
        %v539 = vadd.f32 %v462, %v538
        %v540 = vpop.f32.mrb[0].mxu0
        %v541 = vadd.f32 %v464, %v540
        %542 = vdwg.mxu0
        %543 = vmatprep.subr.mxu0 %v346
        %544 = vmatpush1.msra.mxu0 %v345
        %545 = vmatprep.subr.mxu0 %v348
        %546 = vmatpush1.msra.mxu0 %v347
        %547 = vmatprep.subr.mxu0 %v350
        %548 = vmatpush1.msra.mxu0 %v349
        %549 = vmatprep.subr.mxu0 %v352
        %550 = vmatpush1.msra.mxu0 %v351
        %551 = vmatprep.subr.mxu0 %v354
        %552 = vmatpush1.msra.mxu0 %v353
        %553 = vmatprep.subr.mxu0 %v356
        %554 = vmatpush1.msra.mxu0 %v355
        %555 = vmatprep.subr.mxu0 %v358
        %556 = vmatpush1.msra.mxu0 %v357
        %557 = vmatprep.subr.mxu0 %v360
        %558 = vmatpush1.msra.mxu0 %v359
        %559 = vmatprep.subr.mxu0 %v362
        %560 = vmatpush1.msra.mxu0 %v361
        %561 = vmatprep.subr.mxu0 %v364
        %562 = vmatpush1.msra.mxu0 %v363
        %563 = vmatprep.subr.mxu0 %v366
        %564 = vmatpush1.msra.mxu0 %v365
        %565 = vmatprep.subr.mxu0 %v368
        %566 = vmatpush1.msra.mxu0 %v367
        %567 = vmatprep.subr.mxu0 %v370
        %568 = vmatpush1.msra.mxu0 %v369
        %569 = vmatprep.subr.mxu0 %v372
        %570 = vmatpush1.msra.mxu0 %v371
        %571 = vmatprep.subr.mxu0 %v374
        %572 = vmatpush1.msra.mxu0 %v373
        %573 = vmatprep.subr.mxu0 %v376
        %574 = vmatpush1.msra.mxu0 %v375
        %575 = vmatprep.subr.mxu0 0.0
        %576 = vmatpush1.msra.mxu0 0.0
        %577 = vmatprep.subr.mxu0 0.0
        %578 = vmatpush1.msra.mxu0 0.0
        %579 = vmatprep.subr.mxu0 0.0
        %580 = vmatpush1.msra.mxu0 0.0
        %581 = vmatprep.subr.mxu0 0.0
        %582 = vmatpush1.msra.mxu0 0.0
        %583 = vmatprep.subr.mxu0 0.0
        %584 = vmatpush1.msra.mxu0 0.0
        %585 = vmatprep.subr.mxu0 0.0
        %586 = vmatpush1.msra.mxu0 0.0
        %587 = vmatprep.subr.mxu0 0.0
        %588 = vmatpush1.msra.mxu0 0.0
        %589 = vmatprep.subr.mxu0 0.0
        %590 = vmatpush1.msra.mxu0 0.0
        %591 = vmatprep.subr.mxu0 0.0
        %592 = vmatpush1.msra.mxu0 0.0
        %593 = vmatprep.subr.mxu0 0.0
        %594 = vmatpush1.msra.mxu0 0.0
        %595 = vmatprep.subr.mxu0 0.0
        %596 = vmatpush1.msra.mxu0 0.0
        %597 = vmatprep.subr.mxu0 0.0
        %598 = vmatpush1.msra.mxu0 0.0
        %599 = vmatprep.subr.mxu0 0.0
        %600 = vmatpush1.msra.mxu0 0.0
        %601 = vmatprep.subr.mxu0 0.0
        %602 = vmatpush1.msra.mxu0 0.0
        %603 = vmatprep.subr.mxu0 0.0
        %604 = vmatpush1.msra.mxu0 0.0
        %605 = vmatprep.subr.mxu0 0.0
        %606 = vmatpush1.msra.mxu0 0.0
        %607 = vmatprep.mubr.f32.mxu0 0.0
        %608 = vmatmul.mubr.f32.gmra.mrb[0].mxu0 %v211
        %v609 = vpop.f32.mrb[0].mxu0
        %v610 = vadd.f32 %v533, %v609
        %v611 = vpop.f32.mrb[0].mxu0
        %v612 = vadd.f32 %v535, %v611
        %613 = vmatprep.mubr.f32.mxu0 0.0
        %614 = vmatmul.mubr.f32.gmra.mrb[0].mxu0 %v216
        %v615 = vpop.f32.mrb[0].mxu0
        %v616 = vadd.f32 %v539, %v615
        %v617 = vpop.f32.mrb[0].mxu0
        %v618 = vadd.f32 %v541, %v617
        %619 = vdwg.mxu0
        %v620 = vmul.f32 %v610, %v610
        %v621 = vmul.f32 %v612, %v612
        %v622 = vmul.f32 %v616, %v616
        %v623 = vmul.f32 %v618, %v618
        %v624 = vadd.f32 %v620, %v621
        %625 = vadd.xlane.f32.xlu0 %v624
        %v626 = vpop.xlane.xlu0 %625
        %v627 = vadd.f32 %v622, %v623
        %628 = vadd.xlane.f32.xlu0 %v627
        %v629 = vpop.xlane.xlu0 %628
        %v630 = vrsqrt.pop %v626
        %v631 = vrsqrt.pop %v629
        %v632 = vmul.f32 %v610, %v630
        %v633 = vmul.f32 %v612, %v630
        %v634 = vmul.f32 %v616, %v631
        %v635 = vmul.f32 %v618, %v631
        %636 = vst [vmem:[%s204] sm:$0xff] %v632
        %637 = vst [vmem:[%s204 + $0x8] sm:$0xff] %v633
        %638 = vst [vmem:[%s204 + $0x10] sm:$0xff] %v634
        %639 = vst [vmem:[%s204 + $0x18] sm:$0xff] %v635
        %s640 = sand.u32 %s97, 1
        %s641 = scalar_lea.sflag [#allocation4], %s640
        %s642 = sand.u32 %s97, 1
        %s643 = smul.addr %s642, 32
        %s644 = scalar_lea.vmem [#allocation7], %s643
        // Predicated region
        $region41: #{tpu_custom_call.1} parent=31 // pred_check
          %p645 = pneg %p107
        $region42: #{tpu_custom_call.1} parent=31 // pred_check_branch
          %647 = sbr.rel (%p645) target = $region44
        $region43: #{tpu_custom_call.1} parent=31 // pred_region
          %s648 = smul.u32 2, %s21
          %s650 = ssub.s32 512, 512
          %651 = vsyncadd %s641, %s650
          %s652 = smul.addr %s648, 2
          %s653 = smul.addr %s652, 128
          %s654 = scalar_lea.hbm %s3, %s653
          %s655 = sshll.u32 %s644, 4
          %s656 = int_to_ptr.vmem [resolvable:$true] %s655
          %661 = dma.vmem_to_hbm [thread:$0]  %s656, 512, %s654, %s641, 256, 256, 16
        $region44: #{tpu_custom_call.1} parent=31 // pred_fallthru
          _
      $region32: #{tpu_custom_call.1} parent=5 // pred_fallthru
        _
      %p662 = scmp.le.s32.totalorder 2, %s16
      // Predicated region
      $region45: #{tpu_custom_call.1} parent=5 // pred_check
        %p663 = pneg %p662
      $region46: #{tpu_custom_call.1} parent=5 // pred_check_branch
        %665 = sbr.rel (%p663) target = $region48
      $region47: #{tpu_custom_call.1} parent=5 // pred_region
        %s666 = ssub.s32 %s16, 2
        // Predicated region
        $region49: #{tpu_custom_call.1} parent=47 // pred_check
          %p667 = pneg %p113
        $region50: #{tpu_custom_call.1} parent=47 // pred_check_branch
          %669 = sbr.rel (%p667) target = $region52
        $region51: #{tpu_custom_call.1} parent=47 // pred_region
          %s670 = sand.u32 %s98, 1
          %s671 = scalar_lea.sflag [#allocation4], %s670
          %s672 = sand.u32 %s98, 1
          %s673 = smul.addr %s672, 32
          %s674 = scalar_lea.vmem [#allocation7], %s673
          %675 = dma.done %s671, 512
        $region52: #{tpu_custom_call.1} parent=47 // pred_fallthru
          _
      $region48: #{tpu_custom_call.1} parent=5 // pred_fallthru
        _
    $region6: #{tpu_custom_call.1} parent=1 // loop_footer
      %s20 = sadd.s32 1, %s16
    $region7: #{tpu_custom_call.1} parent=1 // loop_footer_branch
      %15 = sbr.rel target = $region3
    $region8: #{tpu_custom_call.1} parent=1 // loop_exit
      _
    %676 = vsyncpa [#allocation3], 1
    %s677 = scalar_lea.sflag [#allocation3], 1
    %678 = vsyncpa %s677, 1
    %679 = vsyncpa [#allocation6], 1
    %680 = vsyncpa [#allocation4], 1
    %s681 = scalar_lea.sflag [#allocation4], 1
    %682 = vsyncpa %s681, 1

</llo_original>
